<compile_context>
chip_gen: v7x
topology: tpu7x:2x2x1
jax: 0.10.0
libtpu: 0.0.40
codegen_flags: <defaults>
</compile_context>

<pallas_src>
import jax
import jax.numpy as jnp
from jax import lax
from jax.experimental import pallas as pl
from jax.experimental.pallas import tpu as pltpu

EPS = 1e-5
OUT_DIMS = (5, 7, 9)          # fc1 / fc2 / fc3 class counts
OUT_PAD = 128                 # lane-dense merged-head output slab width
HEAD_COLS = (0, 16, 32)       # column offset of each head inside the slab


# ----------------------------- fused forward kernel --------------------------
def mtl_fused_kernel(patches_ref, cw_ref, cb_ref, w1_ref, b1_ref, w2_ref,
                     b2_ref, out_ref):
    # patches_ref: (1, H*W, K_PAD) bf16  im2col'd image n (zero-padded lanes)
    # cw_ref     : (K_PAD, F_PAD)  bf16  conv weight (taps folded into K)
    # cb_ref     : (1, F_PAD)      f32   conv bias
    # w1_ref     : (F_PAD, HID_PAD) bf16 bn1-folded per-head Linear, concatenated
    # b1_ref     : (1, HID_PAD)    f32
    # w2_ref     : (HID_PAD, OUT_PAD) bf16 bn2-folded final Linear, block-diagonal
    # b2_ref     : (1, OUT_PAD)    f32
    # out_ref    : (1, 1, OUT_PAD) f32   merged logits slab for image n
    hw = patches_ref.shape[1]

    # Encoder stem: one lane-dense MXU matmul (3x3 taps live in the K dim).
    feat = jnp.dot(patches_ref[0], cw_ref[...],
                   preferred_element_type=jnp.float32)            # (HW, F_PAD)
    feat = jnp.maximum(feat + cb_ref[...], 0.0)                   # bias + ReLU

    # AdaptiveAvgPool2d((1,1)) + flatten.
    pooled = jnp.sum(feat, axis=0, keepdims=True) * (1.0 / hw)    # (1, F_PAD)

    # Merged 3-head classifier (eval-mode BN folded into the Linears).
    h = jnp.dot(pooled.astype(w1_ref.dtype), w1_ref[...],
                preferred_element_type=jnp.float32) + b1_ref[...]
    h = jnp.maximum(h, 0.0)
    out = jnp.dot(h.astype(w2_ref.dtype), w2_ref[...],
                  preferred_element_type=jnp.float32) + b2_ref[...]
    out_ref[0] = out


# --------------------------------- wrapper ------------------------------------
def im2col_3x3(x_nchw, k_pad):
    # TODO(synk): for large H,W build the im2col slab in-kernel (masked edge
    # taps from an unpadded NHWC block) to avoid the 9x HBM copy; at these toy
    # shapes the wrapper slab is cheaper than per-tap in-kernel relayouts.
    N, C, H, W = x_nchw.shape
    x = jnp.transpose(x_nchw, (0, 2, 3, 1))                       # NHWC
    xp = jnp.pad(x, ((0, 0), (1, 1), (1, 1), (0, 0)))
    taps = [xp[:, kh:kh + H, kw:kw + W, :]
            for kh in range(3) for kw in range(3)]                # (kh,kw,c) order
    patches = jnp.concatenate(taps, axis=-1).reshape(N, H * W, 9 * C)
    patches = jnp.pad(patches, ((0, 0), (0, 0), (0, k_pad - 9 * C)))
    return patches.astype(jnp.bfloat16)


def multitask_forward(x_nchw, params):
    cw, cb, w1, b1, w2, b2 = params
    N, C, H, W = x_nchw.shape
    HW = H * W
    k_pad, f_pad = cw.shape
    hid_pad, out_pad = w2.shape

    patches = im2col_3x3(x_nchw, k_pad)                           # (N, HW, K_PAD)

    flops = 2 * N * (HW * k_pad * f_pad + f_pad * hid_pad + hid_pad * out_pad)
    bytes_accessed = (patches.size * 2 + cw.size * 2 + w1.size * 2 + w2.size * 2
                      + (cb.size + b1.size + b2.size) * 4 + N * out_pad * 4)

    out = pl.pallas_call(
        mtl_fused_kernel,
        out_shape=jax.ShapeDtypeStruct((N, 1, out_pad), jnp.float32),
        grid_spec=pltpu.PrefetchScalarGridSpec(
            num_scalar_prefetch=0,
            grid=(N,),                                            # batch only
            in_specs=[
                pl.BlockSpec((1, HW, k_pad), lambda n: (n, 0, 0)),
                pl.BlockSpec((k_pad, f_pad), lambda n: (0, 0)),   # resident
                pl.BlockSpec((1, f_pad), lambda n: (0, 0)),
                pl.BlockSpec((f_pad, hid_pad), lambda n: (0, 0)),
                pl.BlockSpec((1, hid_pad), lambda n: (0, 0)),
                pl.BlockSpec((hid_pad, out_pad), lambda n: (0, 0)),
                pl.BlockSpec((1, out_pad), lambda n: (0, 0)),
            ],
            out_specs=pl.BlockSpec((1, 1, out_pad), lambda n: (n, 0, 0)),
        ),
        compiler_params=pltpu.CompilerParams(
            dimension_semantics=("parallel",)),
        cost_estimate=pl.CostEstimate(flops=flops, transcendentals=0,
                                      bytes_accessed=bytes_accessed),
    )(patches, cw, cb, w1, b1, w2, b2)

    out = out.reshape(N, out_pad)
    sexy = out[:, HEAD_COLS[0]:HEAD_COLS[0] + OUT_DIMS[0]]
    flag = out[:, HEAD_COLS[1]:HEAD_COLS[1] + OUT_DIMS[1]]
    violence = out[:, HEAD_COLS[2]:HEAD_COLS[2] + OUT_DIMS[2]]
    return sexy, flag, violence


# ------------------------------ parameter setup -------------------------------
def fold_bn(gamma, beta, running_mean, running_var):
    scale = gamma / jnp.sqrt(running_var + EPS)
    shift = beta - running_mean * scale
    return scale, shift


def init_params(key, c_in, n_features):
    F = n_features
    ks = jax.random.split(key, 26)
    ki = iter(ks)

    conv_w = jax.random.normal(next(ki), (3, 3, c_in, F), jnp.float32) * 0.05
    conv_b = jax.random.normal(next(ki), (F,), jnp.float32) * 0.05

    raw_heads = []
    for d in OUT_DIMS:
        g1 = jax.random.normal(next(ki), (F,), jnp.float32) * 0.1 + 1.0
        be1 = jax.random.normal(next(ki), (F,), jnp.float32) * 0.1
        g2 = jax.random.normal(next(ki), (F,), jnp.float32) * 0.1 + 1.0
        be2 = jax.random.normal(next(ki), (F,), jnp.float32) * 0.1
        w_lin = jax.random.normal(next(ki), (F, F), jnp.float32) * 0.05
        b_lin = jax.random.normal(next(ki), (F,), jnp.float32) * 0.05
        w_fin = jax.random.normal(next(ki), (F, d), jnp.float32) * 0.05
        b_fin = jax.random.normal(next(ki), (d,), jnp.float32) * 0.05
        raw_heads.append((g1, be1, g2, be2, w_lin, b_lin, w_fin, b_fin))
    return (conv_w, conv_b), raw_heads


def pack_params(conv_w, conv_b, raw_heads, c_in, n_features):
    F = n_features
    K = 9 * c_in
    k_pad = -(-K // 128) * 128
    f_pad = -(-F // 128) * 128
    hid_pad = -(-(3 * F) // 128) * 128

    cw = jnp.zeros((k_pad, f_pad), jnp.float32).at[:K, :F].set(
        conv_w.reshape(K, F))                                     # (kh,kw,c) rows
    cb = jnp.zeros((1, f_pad), jnp.float32).at[0, :F].set(conv_b)

    w1 = jnp.zeros((f_pad, hid_pad), jnp.float32)
    b1 = jnp.zeros((1, hid_pad), jnp.float32)
    w2 = jnp.zeros((hid_pad, OUT_PAD), jnp.float32)
    b2 = jnp.zeros((1, OUT_PAD), jnp.float32)

    for h, (d, raw) in enumerate(zip(OUT_DIMS, raw_heads)):
        g1, be1, g2, be2, w_lin, b_lin, w_fin, b_fin = raw
        # Eval-mode BN (fresh running stats: mean=0, var=1).
        s1, sh1 = fold_bn(g1, be1, jnp.zeros(F), jnp.ones(F))
        s2, sh2 = fold_bn(g2, be2, jnp.zeros(F), jnp.ones(F))
        # BN precedes each Linear in the reference -> input-row scaling fold.
        w1h = s1[:, None] * w_lin
        b1h = sh1 @ w_lin + b_lin
        w2h = s2[:, None] * w_fin
        b2h = sh2 @ w_fin + b_fin
        col = HEAD_COLS[h]
        w1 = w1.at[:F, h * F:(h + 1) * F].set(w1h)
        b1 = b1.at[0, h * F:(h + 1) * F].set(b1h)
        w2 = w2.at[h * F:(h + 1) * F, col:col + d].set(w2h)
        b2 = b2.at[0, col:col + d].set(b2h)

    return (cw.astype(jnp.bfloat16), cb,
            w1.astype(jnp.bfloat16), b1,
            w2.astype(jnp.bfloat16), b2)


# ------------------------- pure-JAX (unfolded) reference -----------------------
def reference_forward(x_nchw, conv_w, conv_b, raw_heads):
    x = jnp.transpose(x_nchw, (0, 2, 3, 1))
    y = lax.conv_general_dilated(x, conv_w, window_strides=(1, 1),
                                 padding="SAME",
                                 dimension_numbers=("NHWC", "HWIO", "NHWC"))
    y = jnp.maximum(y + conv_b, 0.0)
    pooled = jnp.mean(y, axis=(1, 2))                             # (N, F)
    F = pooled.shape[1]
    outs = []
    for g1, be1, g2, be2, w_lin, b_lin, w_fin, b_fin in raw_heads:
        s1, sh1 = fold_bn(g1, be1, jnp.zeros(F), jnp.ones(F))
        s2, sh2 = fold_bn(g2, be2, jnp.zeros(F), jnp.ones(F))
        h = (pooled * s1 + sh1) @ w_lin + b_lin                   # bn1 -> linear
        h = jnp.maximum(h, 0.0)                                   # relu1
        o = (h * s2 + sh2) @ w_fin + b_fin                        # bn2 -> final
        outs.append(o)
    return tuple(outs)


# ----------------------------------- main --------------------------------------
if __name__ == "__main__":
    N, C, H, W = 2, 4, 16, 16
    N_FEATURES = 32

    key = jax.random.PRNGKey(0)
    kx, kp = jax.random.split(key)
    x = jax.random.normal(kx, (N, C, H, W), jnp.float32)          # NCHW input
    (conv_w, conv_b), raw_heads = init_params(kp, C, N_FEATURES)
    params = pack_params(conv_w, conv_b, raw_heads, C, N_FEATURES)

    sexy, flag, violence = multitask_forward(x, params)
    jax.block_until_ready((sexy, flag, violence))

    assert sexy.shape == (N, 5)
    assert flag.shape == (N, 7)
    assert violence.shape == (N, 9)

    # Validate BN fold + im2col against the unfolded f32 reference
    # (kernel uses bf16 MXU inputs with f32 accumulation -> loose tolerance).
    ref = reference_forward(x, conv_w, conv_b, raw_heads)
    for got, want in zip((sexy, flag, violence), ref):
        err = float(jnp.max(jnp.abs(got - want)))
        assert jnp.allclose(got, want, rtol=2e-2, atol=2e-2), err

    print("KERNEL_OK")
</pallas_src>

<mosaic_0001>
module attributes {stable_mosaic.version = 11 : i64} {
  func.func @mtl_fused_kernel(%arg0: i32, %arg1: memref<1x256x128xbf16, #tpu.memory_space<vmem>>, %arg2: memref<128x128xbf16, #tpu.memory_space<vmem>>, %arg3: memref<1x128xf32, #tpu.memory_space<vmem>>, %arg4: memref<128x128xbf16, #tpu.memory_space<vmem>>, %arg5: memref<1x128xf32, #tpu.memory_space<vmem>>, %arg6: memref<128x128xbf16, #tpu.memory_space<vmem>>, %arg7: memref<1x128xf32, #tpu.memory_space<vmem>>, %arg8: memref<1x1x128xf32, #tpu.memory_space<vmem>>) attributes {dimension_semantics = [#tpu.dimension_semantics<parallel>], iteration_bounds = array<i64: 2>, scalar_prefetch = 0 : i64, scratch_operands = 0 : i64, tpu.core_type = #tpu.core_type<tc>, window_params = [{transform_indices = @transform_0, window_bounds = array<i64: 1, 256, 128>}, {pipeline_mode = #tpu.pipeline_mode<synchronous>, transform_indices = @transform_1, window_bounds = array<i64: 128, 128>}, {pipeline_mode = #tpu.pipeline_mode<synchronous>, transform_indices = @transform_2, window_bounds = array<i64: 1, 128>}, {pipeline_mode = #tpu.pipeline_mode<synchronous>, transform_indices = @transform_3, window_bounds = array<i64: 128, 128>}, {pipeline_mode = #tpu.pipeline_mode<synchronous>, transform_indices = @transform_4, window_bounds = array<i64: 1, 128>}, {pipeline_mode = #tpu.pipeline_mode<synchronous>, transform_indices = @transform_5, window_bounds = array<i64: 128, 128>}, {pipeline_mode = #tpu.pipeline_mode<synchronous>, transform_indices = @transform_6, window_bounds = array<i64: 1, 128>}, {transform_indices = @transform_7, window_bounds = array<i64: 1, 1, 128>}]} {
    %c0 = arith.constant 0 : index
    %c0_0 = arith.constant 0 : index
    %c0_1 = arith.constant 0 : index
    %0 = vector.load %arg1[%c0, %c0_0, %c0_1] : memref<1x256x128xbf16, #tpu.memory_space<vmem>>, vector<1x256x128xbf16>
    %1 = vector.shape_cast %0 : vector<1x256x128xbf16> to vector<256x128xbf16>
    %c0_2 = arith.constant 0 : index
    %c0_3 = arith.constant 0 : index
    %2 = vector.load %arg2[%c0_2, %c0_3] : memref<128x128xbf16, #tpu.memory_space<vmem>>, vector<128x128xbf16>
    %cst = arith.constant dense<0.000000e+00> : vector<256x128xf32>
    %3 = tpu.matmul %1, %2, %cst {dimension_numbers = #tpu.dot_dimension_numbers<[1], [0], [0], [1], [0, 0, 1, 1], [], []>} : vector<256x128xbf16>, vector<128x128xbf16>, vector<256x128xf32> -> vector<256x128xf32>
    %c0_4 = arith.constant 0 : index
    %c0_5 = arith.constant 0 : index
    %4 = vector.load %arg3[%c0_4, %c0_5] : memref<1x128xf32, #tpu.memory_space<vmem>>, vector<1x128xf32>
    %5 = vector.broadcast %4 : vector<1x128xf32> to vector<256x128xf32>
    %6 = arith.addf %3, %5 : vector<256x128xf32>
    %cst_6 = arith.constant 0.000000e+00 : f32
    %7 = vector.broadcast %cst_6 : f32 to vector<256x128xf32>
    %8 = arith.maximumf %6, %7 : vector<256x128xf32>
    %cst_7 = arith.constant dense<0.000000e+00> : vector<128xf32>
    %9 = vector.multi_reduction <add>, %8, %cst_7 [0] : vector<256x128xf32> to vector<128xf32>
    %10 = vector.shape_cast %9 : vector<128xf32> to vector<1x128xf32>
    %cst_8 = arith.constant 3.906250e-03 : f32
    %11 = vector.broadcast %cst_8 : f32 to vector<1x128xf32>
    %12 = arith.mulf %10, %11 : vector<1x128xf32>
    %13 = arith.truncf %12 : vector<1x128xf32> to vector<1x128xbf16>
    %c0_9 = arith.constant 0 : index
    %c0_10 = arith.constant 0 : index
    %14 = vector.load %arg4[%c0_9, %c0_10] : memref<128x128xbf16, #tpu.memory_space<vmem>>, vector<128x128xbf16>
    %cst_11 = arith.constant dense<0.000000e+00> : vector<1x128xf32>
    %15 = tpu.matmul %13, %14, %cst_11 {dimension_numbers = #tpu.dot_dimension_numbers<[1], [0], [0], [1], [0, 0, 1, 1], [], []>} : vector<1x128xbf16>, vector<128x128xbf16>, vector<1x128xf32> -> vector<1x128xf32>
    %c0_12 = arith.constant 0 : index
    %c0_13 = arith.constant 0 : index
    %16 = vector.load %arg5[%c0_12, %c0_13] : memref<1x128xf32, #tpu.memory_space<vmem>>, vector<1x128xf32>
    %17 = arith.addf %15, %16 : vector<1x128xf32>
    %cst_14 = arith.constant 0.000000e+00 : f32
    %18 = vector.broadcast %cst_14 : f32 to vector<1x128xf32>
    %19 = arith.maximumf %17, %18 : vector<1x128xf32>
    %20 = arith.truncf %19 : vector<1x128xf32> to vector<1x128xbf16>
    %c0_15 = arith.constant 0 : index
    %c0_16 = arith.constant 0 : index
    %21 = vector.load %arg6[%c0_15, %c0_16] : memref<128x128xbf16, #tpu.memory_space<vmem>>, vector<128x128xbf16>
    %cst_17 = arith.constant dense<0.000000e+00> : vector<1x128xf32>
    %22 = tpu.matmul %20, %21, %cst_17 {dimension_numbers = #tpu.dot_dimension_numbers<[1], [0], [0], [1], [0, 0, 1, 1], [], []>} : vector<1x128xbf16>, vector<128x128xbf16>, vector<1x128xf32> -> vector<1x128xf32>
    %c0_18 = arith.constant 0 : index
    %c0_19 = arith.constant 0 : index
    %23 = vector.load %arg7[%c0_18, %c0_19] : memref<1x128xf32, #tpu.memory_space<vmem>>, vector<1x128xf32>
    %24 = arith.addf %22, %23 : vector<1x128xf32>
    %c0_20 = arith.constant 0 : index
    %c0_21 = arith.constant 0 : index
    %c0_22 = arith.constant 0 : index
    %25 = vector.load %arg8[%c0_20, %c0_21, %c0_22] : memref<1x1x128xf32, #tpu.memory_space<vmem>>, vector<1x1x128xf32>
    %26 = vector.shape_cast %25 : vector<1x1x128xf32> to vector<1x128xf32>
    %27 = vector.shape_cast %24 : vector<1x128xf32> to vector<1x1x128xf32>
    tpu.vector_store %arg8[%c0_20, %c0_21, %c0_22], %27 {strides = array<i32>} : memref<1x1x128xf32, #tpu.memory_space<vmem>>, vector<1x1x128xf32>,
    return
  }
  func.func @transform_0(%arg0: i32) -> (i32, i32, i32) {
    %c0_i32 = arith.constant 0 : i32
    %c0_i32_0 = arith.constant 0 : i32
    %c0_i32_1 = arith.constant 0 : i32
    return %arg0, %c0_i32, %c0_i32_0 : i32, i32, i32
  }
  func.func @transform_1(%arg0: i32) -> (i32, i32) {
    %c0_i32 = arith.constant 0 : i32
    %c0_i32_0 = arith.constant 0 : i32
    %c0_i32_1 = arith.constant 0 : i32
    return %c0_i32, %c0_i32_0 : i32, i32
  }
  func.func @transform_2(%arg0: i32) -> (i32, i32) {
    %c0_i32 = arith.constant 0 : i32
    %c0_i32_0 = arith.constant 0 : i32
    %c0_i32_1 = arith.constant 0 : i32
    return %c0_i32, %c0_i32_0 : i32, i32
  }
  func.func @transform_3(%arg0: i32) -> (i32, i32) {
    %c0_i32 = arith.constant 0 : i32
    %c0_i32_0 = arith.constant 0 : i32
    %c0_i32_1 = arith.constant 0 : i32
    return %c0_i32, %c0_i32_0 : i32, i32
  }
  func.func @transform_4(%arg0: i32) -> (i32, i32) {
    %c0_i32 = arith.constant 0 : i32
    %c0_i32_0 = arith.constant 0 : i32
    %c0_i32_1 = arith.constant 0 : i32
    return %c0_i32, %c0_i32_0 : i32, i32
  }
  func.func @transform_5(%arg0: i32) -> (i32, i32) {
    %c0_i32 = arith.constant 0 : i32
    %c0_i32_0 = arith.constant 0 : i32
    %c0_i32_1 = arith.constant 0 : i32
    return %c0_i32, %c0_i32_0 : i32, i32
  }
  func.func @transform_6(%arg0: i32) -> (i32, i32) {
    %c0_i32 = arith.constant 0 : i32
    %c0_i32_0 = arith.constant 0 : i32
    %c0_i32_1 = arith.constant 0 : i32
    return %c0_i32, %c0_i32_0 : i32, i32
  }
  func.func @transform_7(%arg0: i32) -> (i32, i32, i32) {
    %c0_i32 = arith.constant 0 : i32
    %c0_i32_0 = arith.constant 0 : i32
    %c0_i32_1 = arith.constant 0 : i32
    return %arg0, %c0_i32, %c0_i32_0 : i32, i32, i32
  }
}

</mosaic_0001>

<llo_original>
// kernel: tpu_custom_call.1
$region0: #{tpu_custom_call.1}
  #allocation0 [shape = 'u32[]', space=smem, size = 0x4, offset = 0x4, fixed_abs, tag = 'smem constant byte address 0x4 - core index']
  #allocation1 [shape = 'u32[144,128]{1,0:T(1,128)}', space=vmem, size = 0x12000, scoped, tag = 'internal scratch']
  %s0 = inlined_call_operand.hbm [shape: bf16[2,256,128], index: 0, kind: input, shape index: {}]
  %s1 = inlined_call_operand.hbm [shape: bf16[128,128], index: 1, kind: input, shape index: {}]
  %s2 = inlined_call_operand.vmem [shape: f32[1,128], index: 2, kind: input, shape index: {}]
  %s3 = inlined_call_operand.hbm [shape: bf16[128,128], index: 3, kind: input, shape index: {}]
  %s4 = inlined_call_operand.vmem [shape: f32[1,128], index: 4, kind: input, shape index: {}]
  %s5 = inlined_call_operand.hbm [shape: bf16[128,128], index: 5, kind: input, shape index: {}]
  %s6 = inlined_call_operand.vmem [shape: f32[1,128], index: 6, kind: input, shape index: {}]
  %s7 = inlined_call_operand.hbm [shape: f32[2,1,128], index: 7, kind: output, shape index: {}]
  %s8 = sld [smem:[#allocation0]]
  $region77: #{tpu_custom_call.1} parent=0
    _
  %s10 = ssub.s32 1, %s8
  %s11 = scalar_select 0, %s10, %s8
  $region1: #{tpu_custom_call.1} parent=0
    #allocation2 [shape = 'u8[131072]{0}', space=vmem, size = 0x20000, scoped, tag = 'input window, operand 0']
    #allocation3 [shape = 's32[2]{0}', space=sflag, size = 0x8, scoped, tag = 'scoped memory for tpu_custom_call.1']
    #allocation4 [shape = 's32[2]{0}', space=sflag, size = 0x8, scoped, tag = 'scoped memory for tpu_custom_call.1']
    #allocation5 [shape = 'u8[32768]{0}', space=vmem, size = 0x8000, scoped, tag = 'input window, operand 1, single buffered']
    #allocation6 [shape = 's32[1]{0}', space=sflag, size = 0x4, scoped, tag = 'scoped memory for tpu_custom_call.1']
    #allocation7 [shape = 'u8[32768]{0}', space=vmem, size = 0x8000, scoped, tag = 'input window, operand 3, single buffered']
    #allocation8 [shape = 'u8[32768]{0}', space=vmem, size = 0x8000, scoped, tag = 'input window, operand 5, single buffered']
    #allocation9 [shape = 's32[1]{0}', space=sflag, size = 0x4, scoped, tag = 'scoped memory for tpu_custom_call.1']
    #allocation10 [shape = 'u8[1024]{0}', space=vmem, size = 0x400, scoped, tag = 'output window, operand 0']
    %12 = vsyncpa [#allocation3], 0
    %s13 = scalar_lea.sflag [#allocation3], 1
    %14 = vsyncpa %s13, 0
    %15 = vsyncpa [#allocation6], 0
    %16 = vsyncpa [#allocation9], 0
    %17 = vsyncpa [#allocation4], 0
    %s18 = scalar_lea.sflag [#allocation4], 1
    %19 = vsyncpa %s18, 0
    loop: start=0, step=1, limit=4
    $region2: #{tpu_custom_call.1} parent=1 // loop_pre_header
      _
    $region3: #{tpu_custom_call.1} parent=1 // loop_header
      %s21 = sphi 0, %s25
      %p22 = scmp.ge.s32.totalorder %s21, 4
      %s31 = sphi 0, %s33
      %s34 = sphi 0, %s31
      %s35 = sphi 0, %s34
      %s51 = sphi 0, %s35
      %s55 = sphi 0, %s55
      %s57 = sphi 0, %s55
      %s58 = sphi 0, %s57
      %s72 = sphi 0, %s58
      %s76 = sphi 0, %s76
      %s78 = sphi 0, %s76
      %s79 = sphi 0, %s78
      %s93 = sphi 0, %s79
      %s97 = sphi 0, %s97
      %s99 = sphi 0, %s97
      %s100 = sphi 0, %s99
      %s114 = sphi 0, %s100
      %s118 = sphi 0, %s118
      %s120 = sphi 0, %s118
      %s121 = sphi 0, %s120
      %s135 = sphi 0, %s121
      %s139 = sphi 0, %s139
      %s141 = sphi 0, %s139
      %s142 = sphi 0, %s141
      %s156 = sphi 0, %s142
      %s160 = sphi 0, %s160
      %s162 = sphi 0, %s160
      %s163 = sphi 0, %s162
      %s177 = sphi 0, %s163
      %s183 = sphi 0, %s185
      %s186 = sphi 0, %s183
      %s187 = sphi 0, %s186
      %s203 = sphi 0, %s187
    $region4: #{tpu_custom_call.1} parent=1 // loop_header_branch
      %24 = sbr.rel (%p22) target = $region8
    $region5: #{tpu_custom_call.1} parent=1 // loop_body
      %s26 = ssub.s32 %s21, 1
      %s27 = ssub.s32 %s21, 2
      %s28 = sadd.s32 %s21, 1
      %s29 = ssub.s32 %s21, %s28
      %p30 = scmp.eq.s32.totalorder %s29, 0
      %s32 = sadd.s32 %s31, 1
      %s33 = scalar_select %p30, %s31, %s32
      %p36 = pneg %p30
      %p37 = scmp.eq.s32.totalorder %s21, 1
      %p38 = por %p36, %p37
      %p39 = scmp.ne.s32.totalorder %s31, %s34
      %p40 = scmp.eq.s32.totalorder %s21, 0
      %p41 = por %p39, %p40
      %p42 = scmp.ne.s32.totalorder %s31, %s34
      %p43 = scmp.eq.s32.totalorder %s26, 1
      %p44 = por %p42, %p43
      %p45 = scmp.ne.s32.totalorder %s34, %s35
      %p46 = scmp.eq.s32.totalorder %s26, 0
      %p47 = por %p45, %p46
      %p48 = scmp.ne.s32.totalorder %s34, %s35
      %p49 = scmp.eq.s32.totalorder %s27, 1
      %p50 = por %p48, %p49
      %p52 = scmp.ne.s32.totalorder %s35, %s51
      %p53 = scmp.eq.s32.totalorder %s27, 0
      %p54 = por %p52, %p53
      %s56 = sadd.s32 %s55, 1
      %p59 = scmp.eq.s32.totalorder %s21, 1
      %p60 = scmp.ne.s32.totalorder %s55, %s57
      %p61 = scmp.eq.s32.totalorder %s21, 0
      %p62 = por %p60, %p61
      %p63 = scmp.ne.s32.totalorder %s55, %s57
      %p64 = scmp.eq.s32.totalorder %s26, 1
      %p65 = por %p63, %p64
      %p66 = scmp.ne.s32.totalorder %s57, %s58
      %p67 = scmp.eq.s32.totalorder %s26, 0
      %p68 = por %p66, %p67
      %p69 = scmp.ne.s32.totalorder %s57, %s58
      %p70 = scmp.eq.s32.totalorder %s27, 1
      %p71 = por %p69, %p70
      %p73 = scmp.ne.s32.totalorder %s58, %s72
      %p74 = scmp.eq.s32.totalorder %s27, 0
      %p75 = por %p73, %p74
      %s77 = sadd.s32 %s76, 1
      %p80 = scmp.eq.s32.totalorder %s21, 1
      %p81 = scmp.ne.s32.totalorder %s76, %s78
      %p82 = scmp.eq.s32.totalorder %s21, 0
      %p83 = por %p81, %p82
      %p84 = scmp.ne.s32.totalorder %s76, %s78
      %p85 = scmp.eq.s32.totalorder %s26, 1
      %p86 = por %p84, %p85
      %p87 = scmp.ne.s32.totalorder %s78, %s79
      %p88 = scmp.eq.s32.totalorder %s26, 0
      %p89 = por %p87, %p88
      %p90 = scmp.ne.s32.totalorder %s78, %s79
      %p91 = scmp.eq.s32.totalorder %s27, 1
      %p92 = por %p90, %p91
      %p94 = scmp.ne.s32.totalorder %s79, %s93
      %p95 = scmp.eq.s32.totalorder %s27, 0
      %p96 = por %p94, %p95
      %s98 = sadd.s32 %s97, 1
      %p101 = scmp.eq.s32.totalorder %s21, 1
      %p102 = scmp.ne.s32.totalorder %s97, %s99
      %p103 = scmp.eq.s32.totalorder %s21, 0
      %p104 = por %p102, %p103
      %p105 = scmp.ne.s32.totalorder %s97, %s99
      %p106 = scmp.eq.s32.totalorder %s26, 1
      %p107 = por %p105, %p106
      %p108 = scmp.ne.s32.totalorder %s99, %s100
      %p109 = scmp.eq.s32.totalorder %s26, 0
      %p110 = por %p108, %p109
      %p111 = scmp.ne.s32.totalorder %s99, %s100
      %p112 = scmp.eq.s32.totalorder %s27, 1
      %p113 = por %p111, %p112
      %p115 = scmp.ne.s32.totalorder %s100, %s114
      %p116 = scmp.eq.s32.totalorder %s27, 0
      %p117 = por %p115, %p116
      %s119 = sadd.s32 %s118, 1
      %p122 = scmp.eq.s32.totalorder %s21, 1
      %p123 = scmp.ne.s32.totalorder %s118, %s120
      %p124 = scmp.eq.s32.totalorder %s21, 0
      %p125 = por %p123, %p124
      %p126 = scmp.ne.s32.totalorder %s118, %s120
      %p127 = scmp.eq.s32.totalorder %s26, 1
      %p128 = por %p126, %p127
      %p129 = scmp.ne.s32.totalorder %s120, %s121
      %p130 = scmp.eq.s32.totalorder %s26, 0
      %p131 = por %p129, %p130
      %p132 = scmp.ne.s32.totalorder %s120, %s121
      %p133 = scmp.eq.s32.totalorder %s27, 1
      %p134 = por %p132, %p133
      %p136 = scmp.ne.s32.totalorder %s121, %s135
      %p137 = scmp.eq.s32.totalorder %s27, 0
      %p138 = por %p136, %p137
      %s140 = sadd.s32 %s139, 1
      %p143 = scmp.eq.s32.totalorder %s21, 1
      %p144 = scmp.ne.s32.totalorder %s139, %s141
      %p145 = scmp.eq.s32.totalorder %s21, 0
      %p146 = por %p144, %p145
      %p147 = scmp.ne.s32.totalorder %s139, %s141
      %p148 = scmp.eq.s32.totalorder %s26, 1
      %p149 = por %p147, %p148
      %p150 = scmp.ne.s32.totalorder %s141, %s142
      %p151 = scmp.eq.s32.totalorder %s26, 0
      %p152 = por %p150, %p151
      %p153 = scmp.ne.s32.totalorder %s141, %s142
      %p154 = scmp.eq.s32.totalorder %s27, 1
      %p155 = por %p153, %p154
      %p157 = scmp.ne.s32.totalorder %s142, %s156
      %p158 = scmp.eq.s32.totalorder %s27, 0
      %p159 = por %p157, %p158
      %s161 = sadd.s32 %s160, 1
      %p164 = scmp.eq.s32.totalorder %s21, 1
      %p165 = scmp.ne.s32.totalorder %s160, %s162
      %p166 = scmp.eq.s32.totalorder %s21, 0
      %p167 = por %p165, %p166
      %p168 = scmp.ne.s32.totalorder %s160, %s162
      %p169 = scmp.eq.s32.totalorder %s26, 1
      %p170 = por %p168, %p169
      %p171 = scmp.ne.s32.totalorder %s162, %s163
      %p172 = scmp.eq.s32.totalorder %s26, 0
      %p173 = por %p171, %p172
      %p174 = scmp.ne.s32.totalorder %s162, %s163
      %p175 = scmp.eq.s32.totalorder %s27, 1
      %p176 = por %p174, %p175
      %p178 = scmp.ne.s32.totalorder %s163, %s177
      %p179 = scmp.eq.s32.totalorder %s27, 0
      %p180 = por %p178, %p179
      %s181 = ssub.s32 %s21, %s28
      %p182 = scmp.eq.s32.totalorder %s181, 0
      %s184 = sadd.s32 %s183, 1
      %s185 = scalar_select %p182, %s183, %s184
      %p188 = pneg %p182
      %p189 = scmp.eq.s32.totalorder %s21, 1
      %p190 = por %p188, %p189
      %p191 = scmp.ne.s32.totalorder %s183, %s186
      %p192 = scmp.eq.s32.totalorder %s21, 0
      %p193 = por %p191, %p192
      %p194 = scmp.ne.s32.totalorder %s183, %s186
      %p195 = scmp.eq.s32.totalorder %s26, 1
      %p196 = por %p194, %p195
      %p197 = scmp.ne.s32.totalorder %s186, %s187
      %p198 = scmp.eq.s32.totalorder %s26, 0
      %p199 = por %p197, %p198
      %p200 = scmp.ne.s32.totalorder %s186, %s187
      %p201 = scmp.eq.s32.totalorder %s27, 1
      %p202 = por %p200, %p201
      %p204 = scmp.ne.s32.totalorder %s187, %s203
      %p205 = scmp.eq.s32.totalorder %s27, 0
      %p206 = por %p204, %p205
      %p207 = scmp.le.s32.totalorder 1, %s21
      %p208 = scmp.lt.s32.totalorder %s21, 3
      %p209 = pnand %p207, %p208
      %p210 = pneg %p209
      // Predicated region
      $region9: #{tpu_custom_call.1} parent=5 // pred_check
        _
      $region10: #{tpu_custom_call.1} parent=5 // pred_check_branch
        %212 = sbr.rel (%p209) target = $region12
      $region11: #{tpu_custom_call.1} parent=5 // pred_region
        %s213 = ssub.s32 %s21, 1
        // Predicated region
        $region13: #{tpu_custom_call.1} parent=11 // pred_check
          %p214 = pneg %p68
        $region14: #{tpu_custom_call.1} parent=11 // pred_check_branch
          %216 = sbr.rel (%p214) target = $region16
        $region15: #{tpu_custom_call.1} parent=11 // pred_region
          %s218 = ssub.s32 1024, 1024
          %219 = vsyncadd [#allocation6], %s218
          %s220 = sshll.u32 [#allocation5], 4
          %s221 = int_to_ptr.vmem [resolvable:$true] %s220
          %226 = dma.hbm_to_vmem [thread:$0]  %s1, 1024, %s221, [#allocation6], 64, 64, 4
        $region16: #{tpu_custom_call.1} parent=11 // pred_fallthru
          _
        // Predicated region
        $region17: #{tpu_custom_call.1} parent=11 // pred_check
          %p227 = pneg %p89
        $region18: #{tpu_custom_call.1} parent=11 // pred_check_branch
          %229 = sbr.rel (%p227) target = $region20
        $region19: #{tpu_custom_call.1} parent=11 // pred_region
          _
        $region20: #{tpu_custom_call.1} parent=11 // pred_fallthru
          _
        // Predicated region
        $region21: #{tpu_custom_call.1} parent=11 // pred_check
          %p230 = pneg %p110
        $region22: #{tpu_custom_call.1} parent=11 // pred_check_branch
          %232 = sbr.rel (%p230) target = $region24
        $region23: #{tpu_custom_call.1} parent=11 // pred_region
          %s234 = ssub.s32 1024, 1024
          %235 = vsyncadd [#allocation6], %s234
          %s236 = sshll.u32 [#allocation7], 4
          %s237 = int_to_ptr.vmem [resolvable:$true] %s236
          %242 = dma.hbm_to_vmem [thread:$0]  %s3, 1024, %s237, [#allocation6], 64, 64, 4
        $region24: #{tpu_custom_call.1} parent=11 // pred_fallthru
          _
        // Predicated region
        $region25: #{tpu_custom_call.1} parent=11 // pred_check
          %p243 = pneg %p131
        $region26: #{tpu_custom_call.1} parent=11 // pred_check_branch
          %245 = sbr.rel (%p243) target = $region28
        $region27: #{tpu_custom_call.1} parent=11 // pred_region
          _
        $region28: #{tpu_custom_call.1} parent=11 // pred_fallthru
          _
        // Predicated region
        $region29: #{tpu_custom_call.1} parent=11 // pred_check
          %p246 = pneg %p152
        $region30: #{tpu_custom_call.1} parent=11 // pred_check_branch
          %248 = sbr.rel (%p246) target = $region32
        $region31: #{tpu_custom_call.1} parent=11 // pred_region
          %s250 = ssub.s32 1024, 1024
          %251 = vsyncadd [#allocation9], %s250
          %s252 = sshll.u32 [#allocation8], 4
          %s253 = int_to_ptr.vmem [resolvable:$true] %s252
          %258 = dma.hbm_to_vmem [thread:$0]  %s5, 1024, %s253, [#allocation9], 64, 64, 4
        $region32: #{tpu_custom_call.1} parent=11 // pred_fallthru
          _
        // Predicated region
        $region33: #{tpu_custom_call.1} parent=11 // pred_check
          %p259 = pneg %p173
        $region34: #{tpu_custom_call.1} parent=11 // pred_check_branch
          %261 = sbr.rel (%p259) target = $region36
        $region35: #{tpu_custom_call.1} parent=11 // pred_region
          _
        $region36: #{tpu_custom_call.1} parent=11 // pred_fallthru
          _
      $region12: #{tpu_custom_call.1} parent=5 // pred_fallthru
        _
      %p262 = scmp.lt.s32.totalorder %s21, 2
      // Predicated region
      $region37: #{tpu_custom_call.1} parent=5 // pred_check
        %p263 = pneg %p262
      $region38: #{tpu_custom_call.1} parent=5 // pred_check_branch
        %265 = sbr.rel (%p263) target = $region40
      $region39: #{tpu_custom_call.1} parent=5 // pred_region
        // Predicated region
        $region41: #{tpu_custom_call.1} parent=39 // pred_check
          %p266 = pneg %p41
        $region42: #{tpu_custom_call.1} parent=39 // pred_check_branch
          %268 = sbr.rel (%p266) target = $region44
        $region43: #{tpu_custom_call.1} parent=39 // pred_region
          %s269 = sand.u32 %s31, 1
          %s270 = scalar_lea.sflag [#allocation3], %s269
          %s271 = sand.u32 %s31, 1
          %s272 = smul.addr %s271, 128
          %s273 = scalar_lea.vmem [#allocation2], %s272
          %s275 = ssub.s32 2048, 2048
          %276 = vsyncadd %s270, %s275
          %s277 = smul.addr %s21, 32
          %s278 = smul.addr %s277, 64
          %s279 = scalar_lea.hbm %s0, %s278
          %s280 = sshll.u32 %s273, 4
          %s281 = int_to_ptr.vmem [resolvable:$true] %s280
          %286 = dma.hbm_to_vmem [thread:$0]  %s279, 2048, %s281, %s270, 64, 64, 4
        $region44: #{tpu_custom_call.1} parent=39 // pred_fallthru
          _
      $region40: #{tpu_custom_call.1} parent=5 // pred_fallthru
        _
      %p287 = scmp.le.s32.totalorder 1, %s21
      %p288 = scmp.lt.s32.totalorder %s21, 3
      %p289 = pnand %p287, %p288
      %p290 = pneg %p289
      // Predicated region
      $region45: #{tpu_custom_call.1} parent=5 // pred_check
        _
      $region46: #{tpu_custom_call.1} parent=5 // pred_check_branch
        %292 = sbr.rel (%p289) target = $region48
      $region47: #{tpu_custom_call.1} parent=5 // pred_region
        %s293 = ssub.s32 %s21, 1
        %s294 = sand.u32 %s34, 1
        %s295 = scalar_lea.sflag [#allocation3], %s294
        %s296 = sand.u32 %s34, 1
        %s297 = smul.addr %s296, 128
        %s298 = scalar_lea.vmem [#allocation2], %s297
        // Predicated region
        $region49: #{tpu_custom_call.1} parent=47 // pred_check
          %p299 = pneg %p47
        $region50: #{tpu_custom_call.1} parent=47 // pred_check_branch
          %301 = sbr.rel (%p299) target = $region52
        $region51: #{tpu_custom_call.1} parent=47 // pred_region
          %302 = dma.done %s295, 2048
        $region52: #{tpu_custom_call.1} parent=47 // pred_fallthru
          _
        // Predicated region
        $region53: #{tpu_custom_call.1} parent=47 // pred_check
          %p303 = pneg %p68
        $region54: #{tpu_custom_call.1} parent=47 // pred_check_branch
          %305 = sbr.rel (%p303) target = $region56
        $region55: #{tpu_custom_call.1} parent=47 // pred_region
          %306 = dma.done [#allocation6], 1024
        $region56: #{tpu_custom_call.1} parent=47 // pred_fallthru
          _
        // Predicated region
        $region57: #{tpu_custom_call.1} parent=47 // pred_check
          %p307 = pneg %p110
        $region58: #{tpu_custom_call.1} parent=47 // pred_check_branch
          %309 = sbr.rel (%p307) target = $region60
        $region59: #{tpu_custom_call.1} parent=47 // pred_region
          %310 = dma.done [#allocation6], 1024
        $region60: #{tpu_custom_call.1} parent=47 // pred_fallthru
          _
        // Predicated region
        $region61: #{tpu_custom_call.1} parent=47 // pred_check
          %p311 = pneg %p152
        $region62: #{tpu_custom_call.1} parent=47 // pred_check_branch
          %313 = sbr.rel (%p311) target = $region64
        $region63: #{tpu_custom_call.1} parent=47 // pred_region
          %314 = dma.done [#allocation9], 1024
        $region64: #{tpu_custom_call.1} parent=47 // pred_fallthru
          _
        %s315 = sand.u32 %s34, 1
        %s316 = scalar_lea.sflag [#allocation3], %s315
        %s317 = sand.u32 %s34, 1
        %s318 = smul.addr %s317, 128
        %s319 = scalar_lea.vmem [#allocation2], %s318
        %p320 = pneg %p47
        %p321 = pneg %p44
        %p322 = pneg %p68
        %p323 = pneg %p65
        %p324 = pneg %p89
        %p325 = pneg %p86
        %p326 = pneg %p110
        %p327 = pneg %p107
        %p328 = pneg %p131
        %p329 = pneg %p128
        %p330 = pneg %p152
        %p331 = pneg %p149
        %p332 = pneg %p173
        %p333 = pneg %p170
        %p334 = pneg %p199
        %p335 = pneg %p196
        %s336 = sand.u32 %s186, 1
        %s337 = scalar_lea.sflag [#allocation4], %s336
        %s338 = sand.u32 %s186, 1
        %s339 = scalar_lea.vmem [#allocation10], %s338
        %v341 = vld [vmem:[%s298] sm:$0xf]
        %v342 = vld [vmem:[%s298 + $0x4] sm:$0xf]
        %v343 = vld [vmem:[%s298 + $0x8] sm:$0xf]
        %v344 = vld [vmem:[%s298 + $0xc] sm:$0xf]
        %v345 = vld [vmem:[%s298 + $0x10] sm:$0xf]
        %v346 = vld [vmem:[%s298 + $0x14] sm:$0xf]
        %v347 = vld [vmem:[%s298 + $0x18] sm:$0xf]
        %v348 = vld [vmem:[%s298 + $0x1c] sm:$0xf]
        %v349 = vld [vmem:[%s298 + $0x20] sm:$0xf]
        %v350 = vld [vmem:[%s298 + $0x24] sm:$0xf]
        %v351 = vld [vmem:[%s298 + $0x28] sm:$0xf]
        %v352 = vld [vmem:[%s298 + $0x2c] sm:$0xf]
        %v353 = vld [vmem:[%s298 + $0x30] sm:$0xf]
        %v354 = vld [vmem:[%s298 + $0x34] sm:$0xf]
        %v355 = vld [vmem:[%s298 + $0x38] sm:$0xf]
        %v356 = vld [vmem:[%s298 + $0x3c] sm:$0xf]
        %v357 = vld [vmem:[%s298 + $0x40] sm:$0xf]
        %v358 = vld [vmem:[%s298 + $0x44] sm:$0xf]
        %v359 = vld [vmem:[%s298 + $0x48] sm:$0xf]
        %v360 = vld [vmem:[%s298 + $0x4c] sm:$0xf]
        %v361 = vld [vmem:[%s298 + $0x50] sm:$0xf]
        %v362 = vld [vmem:[%s298 + $0x54] sm:$0xf]
        %v363 = vld [vmem:[%s298 + $0x58] sm:$0xf]
        %v364 = vld [vmem:[%s298 + $0x5c] sm:$0xf]
        %v365 = vld [vmem:[%s298 + $0x60] sm:$0xf]
        %v366 = vld [vmem:[%s298 + $0x64] sm:$0xf]
        %v367 = vld [vmem:[%s298 + $0x68] sm:$0xf]
        %v368 = vld [vmem:[%s298 + $0x6c] sm:$0xf]
        %v369 = vld [vmem:[%s298 + $0x70] sm:$0xf]
        %v370 = vld [vmem:[%s298 + $0x74] sm:$0xf]
        %v371 = vld [vmem:[%s298 + $0x78] sm:$0xf]
        %v372 = vld [vmem:[%s298 + $0x7c] sm:$0xf]
        %v373 = vld [vmem:[#allocation5] sm:$0xf]
        %v374 = vld [vmem:[#allocation5 + $0x4] sm:$0xf]
        %v375 = vld [vmem:[#allocation5 + $0x8] sm:$0xf]
        %v376 = vld [vmem:[#allocation5 + $0xc] sm:$0xf]
        %v377 = vld [vmem:[#allocation5 + $0x10] sm:$0xf]
        %v378 = vld [vmem:[#allocation5 + $0x14] sm:$0xf]
        %v379 = vld [vmem:[#allocation5 + $0x18] sm:$0xf]
        %v380 = vld [vmem:[#allocation5 + $0x1c] sm:$0xf]
        %v381 = vld [vmem:[#allocation5 + $0x20] sm:$0xf]
        %v382 = vld [vmem:[#allocation5 + $0x24] sm:$0xf]
        %v383 = vld [vmem:[#allocation5 + $0x28] sm:$0xf]
        %v384 = vld [vmem:[#allocation5 + $0x2c] sm:$0xf]
        %v385 = vld [vmem:[#allocation5 + $0x30] sm:$0xf]
        %v386 = vld [vmem:[#allocation5 + $0x34] sm:$0xf]
        %v387 = vld [vmem:[#allocation5 + $0x38] sm:$0xf]
        %v388 = vld [vmem:[#allocation5 + $0x3c] sm:$0xf]
        %v389 = vld [vmem:[%s2] sm:$0x1]
        %v391 = vlaneseq
        %v392 = vshrl.u32 %v391, 7
        %v393 = vsub.s32 0, %v392
        %v394 = vrot.slane %v389, %v393
        %v428 = vunpack.c.l.b16 %v341
        %v429 = vunpack.c.l.b16 %v342
        %v430 = vunpack.c.l.b16 %v343
        %v431 = vunpack.c.l.b16 %v344
        %v432 = vunpack.c.l.b16 %v345
        %v433 = vunpack.c.l.b16 %v346
        %v434 = vunpack.c.l.b16 %v347
        %v435 = vunpack.c.l.b16 %v348
        %v436 = vunpack.c.l.b16 %v349
        %v437 = vunpack.c.l.b16 %v350
        %v438 = vunpack.c.l.b16 %v351
        %v439 = vunpack.c.l.b16 %v352
        %v440 = vunpack.c.l.b16 %v353
        %v441 = vunpack.c.l.b16 %v354
        %v442 = vunpack.c.l.b16 %v355
        %v443 = vunpack.c.l.b16 %v356
        %v444 = vunpack.c.l.b16 %v357
        %v445 = vunpack.c.l.b16 %v358
        %v446 = vunpack.c.l.b16 %v359
        %v447 = vunpack.c.l.b16 %v360
        %v448 = vunpack.c.l.b16 %v361
        %v449 = vunpack.c.l.b16 %v362
        %v450 = vunpack.c.l.b16 %v363
        %v451 = vunpack.c.l.b16 %v364
        %v452 = vunpack.c.l.b16 %v365
        %v453 = vunpack.c.l.b16 %v366
        %v454 = vunpack.c.l.b16 %v367
        %v455 = vunpack.c.l.b16 %v368
        %v456 = vunpack.c.l.b16 %v369
        %v457 = vunpack.c.l.b16 %v370
        %v458 = vunpack.c.l.b16 %v371
        %v459 = vunpack.c.l.b16 %v372
        %v460 = vpack.c.b16 %v429, %v428
        %v461 = vpack.c.b16 %v431, %v430
        %v462 = vpack.c.b16 %v433, %v432
        %v463 = vpack.c.b16 %v435, %v434
        %v464 = vpack.c.b16 %v437, %v436
        %v465 = vpack.c.b16 %v439, %v438
        %v466 = vpack.c.b16 %v441, %v440
        %v467 = vpack.c.b16 %v443, %v442
        %v468 = vpack.c.b16 %v445, %v444
        %v469 = vpack.c.b16 %v447, %v446
        %v470 = vpack.c.b16 %v449, %v448
        %v471 = vpack.c.b16 %v451, %v450
        %v472 = vpack.c.b16 %v453, %v452
        %v473 = vpack.c.b16 %v455, %v454
        %v474 = vpack.c.b16 %v457, %v456
        %v475 = vpack.c.b16 %v459, %v458
        %v508 = vunpack.c.l.b16 %v373
        %v509 = vunpack.c.l.b16 %v374
        %v510 = vunpack.c.l.b16 %v375
        %v511 = vunpack.c.l.b16 %v376
        %v512 = vunpack.c.l.b16 %v377
        %v513 = vunpack.c.l.b16 %v378
        %v514 = vunpack.c.l.b16 %v379
        %v515 = vunpack.c.l.b16 %v380
        %v516 = vunpack.c.l.b16 %v381
        %v517 = vunpack.c.l.b16 %v382
        %v518 = vunpack.c.l.b16 %v383
        %v519 = vunpack.c.l.b16 %v384
        %v520 = vunpack.c.l.b16 %v385
        %v521 = vunpack.c.l.b16 %v386
        %v522 = vunpack.c.l.b16 %v387
        %v523 = vunpack.c.l.b16 %v388
        %v524 = vpack.c.b16 %v509, %v508
        %v525 = vpack.c.b16 %v511, %v510
        %v526 = vpack.c.b16 %v513, %v512
        %v527 = vpack.c.b16 %v515, %v514
        %v528 = vpack.c.b16 %v517, %v516
        %v529 = vpack.c.b16 %v519, %v518
        %v530 = vpack.c.b16 %v521, %v520
        %v531 = vpack.c.b16 %v523, %v522
        %540 = vmatprep.subr.bf16.mxu0 0
        %541 = vmatpush1.bf16.msra.mxu0 %v524
        %542 = vmatprep.subr.bf16.mxu0 0
        %543 = vmatpush1.bf16.msra.mxu0 %v525
        %544 = vmatprep.subr.bf16.mxu0 0
        %545 = vmatpush1.bf16.msra.mxu0 %v526
        %546 = vmatprep.subr.bf16.mxu0 0
        %547 = vmatpush1.bf16.msra.mxu0 %v527
        %548 = vmatprep.subr.bf16.mxu0 0
        %549 = vmatpush1.bf16.msra.mxu0 %v528
        %550 = vmatprep.subr.bf16.mxu0 0
        %551 = vmatpush1.bf16.msra.mxu0 %v529
        %552 = vmatprep.subr.bf16.mxu0 0
        %553 = vmatpush1.bf16.msra.mxu0 %v530
        %554 = vmatprep.subr.bf16.mxu0 0
        %555 = vmatpush1.bf16.msra.mxu0 %v531
        %556 = vmatprep.subr.bf16.mxu0 0
        %557 = vmatpush1.bf16.msra.mxu0 0
        %558 = vmatprep.subr.bf16.mxu0 0
        %559 = vmatpush1.bf16.msra.mxu0 0
        %560 = vmatprep.subr.bf16.mxu0 0
        %561 = vmatpush1.bf16.msra.mxu0 0
        %562 = vmatprep.subr.bf16.mxu0 0
        %563 = vmatpush1.bf16.msra.mxu0 0
        %564 = vmatprep.subr.bf16.mxu0 0
        %565 = vmatpush1.bf16.msra.mxu0 0
        %566 = vmatprep.subr.bf16.mxu0 0
        %567 = vmatpush1.bf16.msra.mxu0 0
        %568 = vmatprep.subr.bf16.mxu0 0
        %569 = vmatpush1.bf16.msra.mxu0 0
        %570 = vmatprep.subr.bf16.mxu0 0
        %571 = vmatpush1.bf16.msra.mxu0 0
        %572 = vmatprep.mubr.bf16.mxu0 0
        %573 = vmatmul.mubr.bf16.gmra.mrb[0].mxu0 %v460
        %v574 = vpop.f32.mrb[0].mxu0
        %v575 = vadd.f32 %v394, %v574
        %v576 = vpop.f32.mrb[0].mxu0
        %v577 = vpop.f32.mrb[0].mxu0
        %v578 = vadd.f32 %v394, %v577
        %v579 = vpop.f32.mrb[0].mxu0
        %580 = vmatprep.mubr.bf16.mxu0 0
        %581 = vmatmul.mubr.bf16.gmra.mrb[0].mxu0 %v461
        %v582 = vpop.f32.mrb[0].mxu0
        %v583 = vadd.f32 %v394, %v582
        %v584 = vpop.f32.mrb[0].mxu0
        %v585 = vpop.f32.mrb[0].mxu0
        %v586 = vadd.f32 %v394, %v585
        %v587 = vpop.f32.mrb[0].mxu0
        %588 = vmatprep.mubr.bf16.mxu0 0
        %589 = vmatmul.mubr.bf16.gmra.mrb[0].mxu0 %v462
        %v590 = vpop.f32.mrb[0].mxu0
        %v591 = vadd.f32 %v394, %v590
        %v592 = vpop.f32.mrb[0].mxu0
        %v593 = vpop.f32.mrb[0].mxu0
        %v594 = vadd.f32 %v394, %v593
        %v595 = vpop.f32.mrb[0].mxu0
        %596 = vmatprep.mubr.bf16.mxu0 0
        %597 = vmatmul.mubr.bf16.gmra.mrb[0].mxu0 %v463
        %v598 = vpop.f32.mrb[0].mxu0
        %v599 = vadd.f32 %v394, %v598
        %v600 = vpop.f32.mrb[0].mxu0
        %v601 = vpop.f32.mrb[0].mxu0
        %v602 = vadd.f32 %v394, %v601
        %v603 = vpop.f32.mrb[0].mxu0
        %604 = vmatprep.mubr.bf16.mxu0 0
        %605 = vmatmul.mubr.bf16.gmra.mrb[0].mxu0 %v464
        %v606 = vpop.f32.mrb[0].mxu0
        %v607 = vadd.f32 %v394, %v606
        %v608 = vpop.f32.mrb[0].mxu0
        %v609 = vpop.f32.mrb[0].mxu0
        %v610 = vadd.f32 %v394, %v609
        %v611 = vpop.f32.mrb[0].mxu0
        %612 = vmatprep.mubr.bf16.mxu0 0
        %613 = vmatmul.mubr.bf16.gmra.mrb[0].mxu0 %v465
        %v614 = vpop.f32.mrb[0].mxu0
        %v615 = vadd.f32 %v394, %v614
        %v616 = vpop.f32.mrb[0].mxu0
        %v617 = vpop.f32.mrb[0].mxu0
        %v618 = vadd.f32 %v394, %v617
        %v619 = vpop.f32.mrb[0].mxu0
        %620 = vmatprep.mubr.bf16.mxu0 0
        %621 = vmatmul.mubr.bf16.gmra.mrb[0].mxu0 %v466
        %v622 = vpop.f32.mrb[0].mxu0
        %v623 = vadd.f32 %v394, %v622
        %v624 = vpop.f32.mrb[0].mxu0
        %v625 = vpop.f32.mrb[0].mxu0
        %v626 = vadd.f32 %v394, %v625
        %v627 = vpop.f32.mrb[0].mxu0
        %628 = vmatprep.mubr.bf16.mxu0 0
        %629 = vmatmul.mubr.bf16.gmra.mrb[0].mxu0 %v467
        %v630 = vpop.f32.mrb[0].mxu0
        %v631 = vadd.f32 %v394, %v630
        %v632 = vpop.f32.mrb[0].mxu0
        %v633 = vpop.f32.mrb[0].mxu0
        %v634 = vadd.f32 %v394, %v633
        %v635 = vpop.f32.mrb[0].mxu0
        %636 = vmatprep.mubr.bf16.mxu0 0
        %637 = vmatmul.mubr.bf16.gmra.mrb[0].mxu0 %v468
        %v638 = vpop.f32.mrb[0].mxu0
        %v639 = vadd.f32 %v394, %v638
        %v640 = vpop.f32.mrb[0].mxu0
        %v641 = vpop.f32.mrb[0].mxu0
        %v642 = vadd.f32 %v394, %v641
        %v643 = vpop.f32.mrb[0].mxu0
        %644 = vmatprep.mubr.bf16.mxu0 0
        %645 = vmatmul.mubr.bf16.gmra.mrb[0].mxu0 %v469
        %v646 = vpop.f32.mrb[0].mxu0
        %v647 = vadd.f32 %v394, %v646
        %v648 = vpop.f32.mrb[0].mxu0
        %v649 = vpop.f32.mrb[0].mxu0
        %v650 = vadd.f32 %v394, %v649
        %v651 = vpop.f32.mrb[0].mxu0
        %652 = vmatprep.mubr.bf16.mxu0 0
        %653 = vmatmul.mubr.bf16.gmra.mrb[0].mxu0 %v470
        %v654 = vpop.f32.mrb[0].mxu0
        %v655 = vadd.f32 %v394, %v654
        %v656 = vpop.f32.mrb[0].mxu0
        %v657 = vpop.f32.mrb[0].mxu0
        %v658 = vadd.f32 %v394, %v657
        %v659 = vpop.f32.mrb[0].mxu0
        %660 = vmatprep.mubr.bf16.mxu0 0
        %661 = vmatmul.mubr.bf16.gmra.mrb[0].mxu0 %v471
        %v662 = vpop.f32.mrb[0].mxu0
        %v663 = vadd.f32 %v394, %v662
        %v664 = vpop.f32.mrb[0].mxu0
        %v665 = vpop.f32.mrb[0].mxu0
        %v666 = vadd.f32 %v394, %v665
        %v667 = vpop.f32.mrb[0].mxu0
        %668 = vmatprep.mubr.bf16.mxu0 0
        %669 = vmatmul.mubr.bf16.gmra.mrb[0].mxu0 %v472
        %v670 = vpop.f32.mrb[0].mxu0
        %v671 = vadd.f32 %v394, %v670
        %v672 = vpop.f32.mrb[0].mxu0
        %v673 = vpop.f32.mrb[0].mxu0
        %v674 = vadd.f32 %v394, %v673
        %v675 = vpop.f32.mrb[0].mxu0
        %676 = vmatprep.mubr.bf16.mxu0 0
        %677 = vmatmul.mubr.bf16.gmra.mrb[0].mxu0 %v473
        %v678 = vpop.f32.mrb[0].mxu0
        %v679 = vadd.f32 %v394, %v678
        %v680 = vpop.f32.mrb[0].mxu0
        %v681 = vpop.f32.mrb[0].mxu0
        %v682 = vadd.f32 %v394, %v681
        %v683 = vpop.f32.mrb[0].mxu0
        %684 = vmatprep.mubr.bf16.mxu0 0
        %685 = vmatmul.mubr.bf16.gmra.mrb[0].mxu0 %v474
        %v686 = vpop.f32.mrb[0].mxu0
        %v687 = vadd.f32 %v394, %v686
        %v688 = vpop.f32.mrb[0].mxu0
        %v689 = vpop.f32.mrb[0].mxu0
        %v690 = vadd.f32 %v394, %v689
        %v691 = vpop.f32.mrb[0].mxu0
        %692 = vmatprep.mubr.bf16.mxu0 0
        %693 = vmatmul.mubr.bf16.gmra.mrb[0].mxu0 %v475
        %v694 = vpop.f32.mrb[0].mxu0
        %v695 = vadd.f32 %v394, %v694
        %v696 = vpop.f32.mrb[0].mxu0
        %v697 = vpop.f32.mrb[0].mxu0
        %v698 = vadd.f32 %v394, %v697
        %v699 = vpop.f32.mrb[0].mxu0
        %700 = vdwg.mxu0
        %v701 = vmax.f32 %v575, 0.0
        %v702 = vmax.f32 %v578, 0.0
        %v703 = vmax.f32 %v583, 0.0
        %v704 = vmax.f32 %v586, 0.0
        %v705 = vmax.f32 %v591, 0.0
        %v706 = vmax.f32 %v594, 0.0
        %v707 = vmax.f32 %v599, 0.0
        %v708 = vmax.f32 %v602, 0.0
        %v709 = vmax.f32 %v607, 0.0
        %v710 = vmax.f32 %v610, 0.0
        %v711 = vmax.f32 %v615, 0.0
        %v712 = vmax.f32 %v618, 0.0
        %v713 = vmax.f32 %v623, 0.0
        %v714 = vmax.f32 %v626, 0.0
        %v715 = vmax.f32 %v631, 0.0
        %v716 = vmax.f32 %v634, 0.0
        %v717 = vmax.f32 %v639, 0.0
        %v718 = vmax.f32 %v642, 0.0
        %v719 = vmax.f32 %v647, 0.0
        %v720 = vmax.f32 %v650, 0.0
        %v721 = vmax.f32 %v655, 0.0
        %v722 = vmax.f32 %v658, 0.0
        %v723 = vmax.f32 %v663, 0.0
        %v724 = vmax.f32 %v666, 0.0
        %v725 = vmax.f32 %v671, 0.0
        %v726 = vmax.f32 %v674, 0.0
        %v727 = vmax.f32 %v679, 0.0
        %v728 = vmax.f32 %v682, 0.0
        %v729 = vmax.f32 %v687, 0.0
        %v730 = vmax.f32 %v690, 0.0
        %v731 = vmax.f32 %v695, 0.0
        %v732 = vmax.f32 %v698, 0.0
        %v733 = vadd.f32 %v701, %v702
        %v734 = vadd.f32 %v733, %v703
        %v735 = vadd.f32 %v734, %v704
        %v736 = vadd.f32 %v735, %v705
        %v737 = vadd.f32 %v736, %v706
        %v738 = vadd.f32 %v737, %v707
        %v739 = vadd.f32 %v738, %v708
        %v740 = vadd.f32 %v739, %v709
        %v741 = vadd.f32 %v740, %v710
        %v742 = vadd.f32 %v741, %v711
        %v743 = vadd.f32 %v742, %v712
        %v744 = vadd.f32 %v743, %v713
        %v745 = vadd.f32 %v744, %v714
        %v746 = vadd.f32 %v745, %v715
        %v747 = vadd.f32 %v746, %v716
        %v748 = vadd.f32 %v747, %v717
        %v749 = vadd.f32 %v748, %v718
        %v750 = vadd.f32 %v749, %v719
        %v751 = vadd.f32 %v750, %v720
        %v752 = vadd.f32 %v751, %v721
        %v753 = vadd.f32 %v752, %v722
        %v754 = vadd.f32 %v753, %v723
        %v755 = vadd.f32 %v754, %v724
        %v756 = vadd.f32 %v755, %v725
        %v757 = vadd.f32 %v756, %v726
        %v758 = vadd.f32 %v757, %v727
        %v759 = vadd.f32 %v758, %v728
        %v760 = vadd.f32 %v759, %v729
        %v761 = vadd.f32 %v760, %v730
        %v762 = vadd.f32 %v761, %v731
        %v763 = vadd.f32 %v762, %v732
        %v764 = vrot.slane %v763, 4
        %v765 = vadd.f32 %v763, %v764
        %v766 = vrot.slane %v765, 2
        %v767 = vadd.f32 %v765, %v766
        %v768 = vrot.slane %v767, 1
        %v769 = vadd.f32 %v767, %v768
        %v770 = vmul.f32 %v769, 0.00390625
        %v771 = vpack.c.bf16 %v770, %v770
        %v772 = vld [vmem:[#allocation7] sm:$0xf]
        %v773 = vld [vmem:[#allocation7 + $0x4] sm:$0xf]
        %v774 = vld [vmem:[#allocation7 + $0x8] sm:$0xf]
        %v775 = vld [vmem:[#allocation7 + $0xc] sm:$0xf]
        %v776 = vld [vmem:[#allocation7 + $0x10] sm:$0xf]
        %v777 = vld [vmem:[#allocation7 + $0x14] sm:$0xf]
        %v778 = vld [vmem:[#allocation7 + $0x18] sm:$0xf]
        %v779 = vld [vmem:[#allocation7 + $0x1c] sm:$0xf]
        %v780 = vld [vmem:[#allocation7 + $0x20] sm:$0xf]
        %v781 = vld [vmem:[#allocation7 + $0x24] sm:$0xf]
        %v782 = vld [vmem:[#allocation7 + $0x28] sm:$0xf]
        %v783 = vld [vmem:[#allocation7 + $0x2c] sm:$0xf]
        %v784 = vld [vmem:[#allocation7 + $0x30] sm:$0xf]
        %v785 = vld [vmem:[#allocation7 + $0x34] sm:$0xf]
        %v786 = vld [vmem:[#allocation7 + $0x38] sm:$0xf]
        %v787 = vld [vmem:[#allocation7 + $0x3c] sm:$0xf]
        %v788 = vld [vmem:[%s4] sm:$0x1]
        %v805 = vunpack.c.l.b16 %v772
        %v806 = vunpack.c.l.b16 %v773
        %v807 = vunpack.c.l.b16 %v774
        %v808 = vunpack.c.l.b16 %v775
        %v809 = vunpack.c.l.b16 %v776
        %v810 = vunpack.c.l.b16 %v777
        %v811 = vunpack.c.l.b16 %v778
        %v812 = vunpack.c.l.b16 %v779
        %v813 = vunpack.c.l.b16 %v780
        %v814 = vunpack.c.l.b16 %v781
        %v815 = vunpack.c.l.b16 %v782
        %v816 = vunpack.c.l.b16 %v783
        %v817 = vunpack.c.l.b16 %v784
        %v818 = vunpack.c.l.b16 %v785
        %v819 = vunpack.c.l.b16 %v786
        %v820 = vunpack.c.l.b16 %v787
        %v821 = vpack.c.b16 %v806, %v805
        %v822 = vpack.c.b16 %v808, %v807
        %v823 = vpack.c.b16 %v810, %v809
        %v824 = vpack.c.b16 %v812, %v811
        %v825 = vpack.c.b16 %v814, %v813
        %v826 = vpack.c.b16 %v816, %v815
        %v827 = vpack.c.b16 %v818, %v817
        %v828 = vpack.c.b16 %v820, %v819
        %837 = vmatprep.subr.bf16.mxu0 0
        %838 = vmatpush1.bf16.msra.mxu0 %v821
        %839 = vmatprep.subr.bf16.mxu0 0
        %840 = vmatpush1.bf16.msra.mxu0 %v822
        %841 = vmatprep.subr.bf16.mxu0 0
        %842 = vmatpush1.bf16.msra.mxu0 %v823
        %843 = vmatprep.subr.bf16.mxu0 0
        %844 = vmatpush1.bf16.msra.mxu0 %v824
        %845 = vmatprep.subr.bf16.mxu0 0
        %846 = vmatpush1.bf16.msra.mxu0 %v825
        %847 = vmatprep.subr.bf16.mxu0 0
        %848 = vmatpush1.bf16.msra.mxu0 %v826
        %849 = vmatprep.subr.bf16.mxu0 0
        %850 = vmatpush1.bf16.msra.mxu0 %v827
        %851 = vmatprep.subr.bf16.mxu0 0
        %852 = vmatpush1.bf16.msra.mxu0 %v828
        %853 = vmatprep.subr.bf16.mxu0 0
        %854 = vmatpush1.bf16.msra.mxu0 0
        %855 = vmatprep.subr.bf16.mxu0 0
        %856 = vmatpush1.bf16.msra.mxu0 0
        %857 = vmatprep.subr.bf16.mxu0 0
        %858 = vmatpush1.bf16.msra.mxu0 0
        %859 = vmatprep.subr.bf16.mxu0 0
        %860 = vmatpush1.bf16.msra.mxu0 0
        %861 = vmatprep.subr.bf16.mxu0 0
        %862 = vmatpush1.bf16.msra.mxu0 0
        %863 = vmatprep.subr.bf16.mxu0 0
        %864 = vmatpush1.bf16.msra.mxu0 0
        %865 = vmatprep.subr.bf16.mxu0 0
        %866 = vmatpush1.bf16.msra.mxu0 0
        %867 = vmatprep.subr.bf16.mxu0 0
        %868 = vmatpush1.bf16.msra.mxu0 0
        %869 = vmatprep.mubr.bf16.mxu0 0
        %870 = vmatmul.mubr.bf16.gmra.mrb[0].mxu0 %v771
        %v871 = vpop.f32.mrb[0].mxu0
        %v872 = vadd.f32 %v788, %v871
        %v873 = vpop.f32.mrb[0].mxu0
        %v874 = vpop.f32.mrb[0].mxu0
        %v875 = vpop.f32.mrb[0].mxu0
        %876 = vdwg.mxu0
        %v877 = vmax.f32 %v872, 0.0
        %v878 = vpack.c.bf16 %v877, %v877
        %v879 = vld [vmem:[#allocation8] sm:$0xf]
        %v880 = vld [vmem:[#allocation8 + $0x4] sm:$0xf]
        %v881 = vld [vmem:[#allocation8 + $0x8] sm:$0xf]
        %v882 = vld [vmem:[#allocation8 + $0xc] sm:$0xf]
        %v883 = vld [vmem:[#allocation8 + $0x10] sm:$0xf]
        %v884 = vld [vmem:[#allocation8 + $0x14] sm:$0xf]
        %v885 = vld [vmem:[#allocation8 + $0x18] sm:$0xf]
        %v886 = vld [vmem:[#allocation8 + $0x1c] sm:$0xf]
        %v887 = vld [vmem:[#allocation8 + $0x20] sm:$0xf]
        %v888 = vld [vmem:[#allocation8 + $0x24] sm:$0xf]
        %v889 = vld [vmem:[#allocation8 + $0x28] sm:$0xf]
        %v890 = vld [vmem:[#allocation8 + $0x2c] sm:$0xf]
        %v891 = vld [vmem:[#allocation8 + $0x30] sm:$0xf]
        %v892 = vld [vmem:[#allocation8 + $0x34] sm:$0xf]
        %v893 = vld [vmem:[#allocation8 + $0x38] sm:$0xf]
        %v894 = vld [vmem:[#allocation8 + $0x3c] sm:$0xf]
        %v895 = vld [vmem:[%s6] sm:$0x1]
        %v912 = vunpack.c.l.b16 %v879
        %v913 = vunpack.c.l.b16 %v880
        %v914 = vunpack.c.l.b16 %v881
        %v915 = vunpack.c.l.b16 %v882
        %v916 = vunpack.c.l.b16 %v883
        %v917 = vunpack.c.l.b16 %v884
        %v918 = vunpack.c.l.b16 %v885
        %v919 = vunpack.c.l.b16 %v886
        %v920 = vunpack.c.l.b16 %v887
        %v921 = vunpack.c.l.b16 %v888
        %v922 = vunpack.c.l.b16 %v889
        %v923 = vunpack.c.l.b16 %v890
        %v924 = vunpack.c.l.b16 %v891
        %v925 = vunpack.c.l.b16 %v892
        %v926 = vunpack.c.l.b16 %v893
        %v927 = vunpack.c.l.b16 %v894
        %v928 = vpack.c.b16 %v913, %v912
        %v929 = vpack.c.b16 %v915, %v914
        %v930 = vpack.c.b16 %v917, %v916
        %v931 = vpack.c.b16 %v919, %v918
        %v932 = vpack.c.b16 %v921, %v920
        %v933 = vpack.c.b16 %v923, %v922
        %v934 = vpack.c.b16 %v925, %v924
        %v935 = vpack.c.b16 %v927, %v926
        %944 = vmatprep.subr.bf16.mxu0 0
        %945 = vmatpush1.bf16.msra.mxu0 %v928
        %946 = vmatprep.subr.bf16.mxu0 0
        %947 = vmatpush1.bf16.msra.mxu0 %v929
        %948 = vmatprep.subr.bf16.mxu0 0
        %949 = vmatpush1.bf16.msra.mxu0 %v930
        %950 = vmatprep.subr.bf16.mxu0 0
        %951 = vmatpush1.bf16.msra.mxu0 %v931
        %952 = vmatprep.subr.bf16.mxu0 0
        %953 = vmatpush1.bf16.msra.mxu0 %v932
        %954 = vmatprep.subr.bf16.mxu0 0
        %955 = vmatpush1.bf16.msra.mxu0 %v933
        %956 = vmatprep.subr.bf16.mxu0 0
        %957 = vmatpush1.bf16.msra.mxu0 %v934
        %958 = vmatprep.subr.bf16.mxu0 0
        %959 = vmatpush1.bf16.msra.mxu0 %v935
        %960 = vmatprep.subr.bf16.mxu0 0
        %961 = vmatpush1.bf16.msra.mxu0 0
        %962 = vmatprep.subr.bf16.mxu0 0
        %963 = vmatpush1.bf16.msra.mxu0 0
        %964 = vmatprep.subr.bf16.mxu0 0
        %965 = vmatpush1.bf16.msra.mxu0 0
        %966 = vmatprep.subr.bf16.mxu0 0
        %967 = vmatpush1.bf16.msra.mxu0 0
        %968 = vmatprep.subr.bf16.mxu0 0
        %969 = vmatpush1.bf16.msra.mxu0 0
        %970 = vmatprep.subr.bf16.mxu0 0
        %971 = vmatpush1.bf16.msra.mxu0 0
        %972 = vmatprep.subr.bf16.mxu0 0
        %973 = vmatpush1.bf16.msra.mxu0 0
        %974 = vmatprep.subr.bf16.mxu0 0
        %975 = vmatpush1.bf16.msra.mxu0 0
        %976 = vmatprep.mubr.bf16.mxu0 0
        %977 = vmatmul.mubr.bf16.gmra.mrb[0].mxu0 %v878
        %v978 = vpop.f32.mrb[0].mxu0
        %v979 = vadd.f32 %v895, %v978
        %v980 = vpop.f32.mrb[0].mxu0
        %v981 = vpop.f32.mrb[0].mxu0
        %v982 = vpop.f32.mrb[0].mxu0
        %983 = vdwg.mxu0
        %984 = vst [vmem:[%s339] sm:$0x1] %v979
        %s985 = sand.u32 %s186, 1
        %s986 = scalar_lea.sflag [#allocation4], %s985
        %s987 = sand.u32 %s186, 1
        %s988 = scalar_lea.vmem [#allocation10], %s987
        // Predicated region
        $region65: #{tpu_custom_call.1} parent=47 // pred_check
          %p989 = pneg %p196
        $region66: #{tpu_custom_call.1} parent=47 // pred_check_branch
          %991 = sbr.rel (%p989) target = $region68
        $region67: #{tpu_custom_call.1} parent=47 // pred_region
          %s993 = ssub.s32 16, 16
          %994 = vsyncadd %s986, %s993
          %s995 = smul.addr %s26, 16
          %s996 = scalar_lea.hbm %s7, %s995
          %s998 = sshll.u32 %s988, 4
          %s999 = int_to_ptr.vmem [resolvable:$true] %s998
          %1001 = dma.vmem_to_hbm [thread:$0]  %s999, 16, %s996, %s986
        $region68: #{tpu_custom_call.1} parent=47 // pred_fallthru
          _
      $region48: #{tpu_custom_call.1} parent=5 // pred_fallthru
        _
      %p1002 = scmp.le.s32.totalorder 2, %s21
      // Predicated region
      $region69: #{tpu_custom_call.1} parent=5 // pred_check
        %p1003 = pneg %p1002
      $region70: #{tpu_custom_call.1} parent=5 // pred_check_branch
        %1005 = sbr.rel (%p1003) target = $region72
      $region71: #{tpu_custom_call.1} parent=5 // pred_region
        %s1006 = ssub.s32 %s21, 2
        // Predicated region
        $region73: #{tpu_custom_call.1} parent=71 // pred_check
          %p1007 = pneg %p202
        $region74: #{tpu_custom_call.1} parent=71 // pred_check_branch
          %1009 = sbr.rel (%p1007) target = $region76
        $region75: #{tpu_custom_call.1} parent=71 // pred_region
          %s1010 = sand.u32 %s187, 1
          %s1011 = scalar_lea.sflag [#allocation4], %s1010
          %s1012 = sand.u32 %s187, 1
          %s1013 = scalar_lea.vmem [#allocation10], %s1012
          %1014 = dma.done %s1011, 16
        $region76: #{tpu_custom_call.1} parent=71 // pred_fallthru
          _
      $region72: #{tpu_custom_call.1} parent=5 // pred_fallthru
        _
    $region6: #{tpu_custom_call.1} parent=1 // loop_footer
      %s25 = sadd.s32 1, %s21
    $region7: #{tpu_custom_call.1} parent=1 // loop_footer_branch
      %20 = sbr.rel target = $region3
    $region8: #{tpu_custom_call.1} parent=1 // loop_exit
      _
    %1015 = vsyncpa [#allocation3], 1
    %s1016 = scalar_lea.sflag [#allocation3], 1
    %1017 = vsyncpa %s1016, 1
    %1018 = vsyncpa [#allocation6], 1
    %1019 = vsyncpa [#allocation9], 1
    %1020 = vsyncpa [#allocation4], 1
    %s1021 = scalar_lea.sflag [#allocation4], 1
    %1022 = vsyncpa %s1021, 1

</llo_original>
